<compile_context>
chip_gen: v7x
topology: tpu7x:2x2x1
jax: 0.10.0
libtpu: 0.0.40
codegen_flags: <defaults>
</compile_context>

<pallas_src>
import jax
import jax.numpy as jnp
from jax.experimental import pallas as pl
from jax.experimental.pallas import tpu as pltpu


# --------------------------------------------------------------------------- helpers
def _round_up(x, m):
    return ((x + m - 1) // m) * m


def _pick_tile(dim, unit, cmax, waste_den=8):
    """Largest multiple of `unit` (<= cmax) whose padding waste on `dim` is <= dim/waste_den."""
    dp = _round_up(max(int(dim), 1), unit)
    cmax = max(unit, min(int(cmax), dp))
    best = unit
    c = unit
    while c <= cmax:
        if _round_up(dp, c) - dp <= dp // waste_den:
            best = c
        c += unit
    return best


def _vmem_limit_bytes(tm, tn, tk, x_bytes, w_bytes, out_bytes):
    # Double-buffered input/output tiles + one f32 accumulator tile (scratch or the
    # resident output block) + small headroom.
    footprint = (2 * tm * tk * x_bytes          # activation tiles (double-buffered)
                 + 2 * tk * tn * w_bytes        # weight tiles (double-buffered)
                 + 2 * tn * 4                   # bias tiles
                 + tm * tn * 4                  # f32 accumulator
                 + 2 * tm * tn * out_bytes)     # output tiles (double-buffered)
    limit = int(footprint * 1.5) + (4 << 20)
    return max(16 << 20, min(limit, 100 << 20))


# --------------------------------------------------------------------------- kernels
def _mlp_kernel_scratch(x_ref, w_ref, b_ref, o_ref, acc_ref):
    """One (tm, tn) output tile; K (axis 2) is the serial reduction axis. Non-f32 out."""
    k = pl.program_id(2)

    @pl.when(k == 0)
    def _init():
        acc_ref[...] = jnp.zeros_like(acc_ref)

    acc_ref[...] += jnp.dot(x_ref[...], w_ref[...],
                            preferred_element_type=jnp.float32)

    @pl.when(k == pl.num_programs(2) - 1)
    def _finalize():
        o_ref[...] = jnp.tanh(acc_ref[...] + b_ref[...]).astype(o_ref.dtype)


def _mlp_kernel_inplace(x_ref, w_ref, b_ref, o_ref):
    """f32 output: accumulate straight into the resident output block (no scratch)."""
    k = pl.program_id(2)

    @pl.when(k == 0)
    def _init():
        o_ref[...] = jnp.zeros_like(o_ref)

    o_ref[...] += jnp.dot(x_ref[...], w_ref[...],
                          preferred_element_type=jnp.float32)

    @pl.when(k == pl.num_programs(2) - 1)
    def _finalize():
        o_ref[...] = jnp.tanh(o_ref[...] + b_ref[...])


def _mlp_call(x_p, w_p, b_p, out_dtype, tm, tn, tk):
    Bp, Kp = x_p.shape
    _, Np = w_p.shape
    grid = (Bp // tm, Np // tn, Kp // tk)

    inplace = jnp.dtype(out_dtype) == jnp.dtype(jnp.float32)
    kernel = _mlp_kernel_inplace if inplace else _mlp_kernel_scratch
    scratch = () if inplace else (pltpu.VMEM((tm, tn), jnp.float32),)

    out_bytes = jnp.dtype(out_dtype).itemsize
    vmem_limit = _vmem_limit_bytes(tm, tn, tk, x_p.dtype.itemsize,
                                   w_p.dtype.itemsize, out_bytes)

    cost = pl.CostEstimate(
        flops=2 * Bp * Kp * Np,
        transcendentals=Bp * Np,                              # tanh
        bytes_accessed=(x_p.size * x_p.dtype.itemsize * (Np // tn)   # x re-read per j
                        + w_p.size * w_p.dtype.itemsize * (Bp // tm)  # W re-read per i
                        + b_p.size * 4
                        + Bp * Np * out_bytes),
    )

    return pl.pallas_call(
        kernel,
        out_shape=jax.ShapeDtypeStruct((Bp, Np), out_dtype),
        grid=grid,
        in_specs=[
            pl.BlockSpec((tm, tk), lambda i, j, k: (i, k)),   # activation tile
            pl.BlockSpec((tk, tn), lambda i, j, k: (k, j)),   # weight tile
            pl.BlockSpec((1, tn), lambda i, j, k: (0, j)),    # bias: K-invariant
        ],
        out_specs=pl.BlockSpec((tm, tn), lambda i, j, k: (i, j)),
        scratch_shapes=scratch,
        compiler_params=pltpu.CompilerParams(
            dimension_semantics=("parallel", "parallel", "arbitrary"),
            vmem_limit_bytes=vmem_limit,
        ),
        cost_estimate=cost,
    )(x_p, w_p, b_p)


# --------------------------------------------------------------------------- wrappers
def prepare_mlp_params(weight, bias, *, tn_max=512, tk_max=None, compute_dtype=None):
    """Pad + cast the Linear parameters ONCE (hoisted out of the per-call path).

    weight: (H_in, H_out)  [= PyTorch dense.weight.T],  bias: (H_out,)
    compute_dtype: optional MXU-feed dtype (jnp.bfloat16 on all gens; an fp8 dtype on
    v7x — v7x's MXU has no int support, so don't use int8 weights there). Accumulation
    stays f32 regardless.
    """
    H_in, H_out = weight.shape
    assert bias.shape == (H_out,)
    w_dtype = jnp.dtype(compute_dtype) if compute_dtype is not None else weight.dtype
    if tk_max is None:
        tk_max = 2048 if jnp.dtype(w_dtype).itemsize <= 2 else 1024

    tn = _pick_tile(H_out, 128, tn_max)
    tk = _pick_tile(H_in, 128, tk_max)
    Np = _round_up(_round_up(H_out, 128), tn)
    Kp = _round_up(_round_up(H_in, 128), tk)

    w_p = weight
    if w_p.dtype != w_dtype:
        w_p = w_p.astype(w_dtype)            # cast before pad (less HBM traffic)
    if w_p.shape != (Kp, Np):
        w_p = jnp.pad(w_p, ((0, Kp - H_in), (0, Np - H_out)))

    b_p = bias.astype(jnp.float32)
    if Np != H_out:
        b_p = jnp.pad(b_p, (0, Np - H_out))
    b_p = b_p.reshape(1, Np)

    return w_p, b_p, H_in, H_out, tn, tk


def _mlp_apply(features, w_p, b_p, H_in, H_out, tn, tk, *, tm_max=256,
               compute_dtype=None):
    B, H_in_f = features.shape
    assert H_in_f == H_in
    Kp, Np = w_p.shape
    out_dtype = features.dtype

    tm = _pick_tile(B, 8, tm_max)
    Bp = _round_up(_round_up(B, 8), tm)

    # v7x has 2 TensorCores sharded over the "parallel" grid axes: make sure at least
    # one parallel axis has >= 2 blocks so the second core isn't idle on small shapes.
    if Bp // tm == 1 and Np // tn == 1:
        if tn >= 256:
            tn //= 2                          # still divides Np (tn is 128-aligned)
        elif tm >= 16 and tm % 16 == 0:
            tm //= 2                          # still divides Bp, stays 8-aligned

    x_dtype = jnp.dtype(compute_dtype) if compute_dtype is not None else features.dtype
    x_p = features
    if x_p.dtype != x_dtype:
        x_p = x_p.astype(x_dtype)
    if x_p.shape != (Bp, Kp):
        x_p = jnp.pad(x_p, ((0, Bp - B), (0, Kp - H_in)))   # zeros are matmul-neutral

    out_p = _mlp_call(x_p, w_p, b_p, out_dtype, tm, tn, tk)
    return out_p[:B, :H_out]


def mlp_layer(features, weight, bias, *, compute_dtype=None, tm_max=256,
              tn_max=512, tk_max=None):
    """One-shot y = tanh(features @ weight + bias). Exact f32 parity by default."""
    w_p, b_p, H_in, H_out, tn, tk = prepare_mlp_params(
        weight, bias, tn_max=tn_max, tk_max=tk_max, compute_dtype=compute_dtype)
    return _mlp_apply(features, w_p, b_p, H_in, H_out, tn, tk,
                      tm_max=tm_max, compute_dtype=compute_dtype)


def make_mlp_layer(weight, bias, *, compute_dtype=jnp.bfloat16, tm_max=256,
                   tn_max=512, tk_max=None):
    """Production path: parameters pre-padded & pre-cast once (bf16 MXU feed by
    default, f32 accumulation); returns features -> tanh(features @ W + b)."""
    w_p, b_p, H_in, H_out, tn, tk = prepare_mlp_params(
        weight, bias, tn_max=tn_max, tk_max=tk_max, compute_dtype=compute_dtype)

    def apply(features):
        return _mlp_apply(features, w_p, b_p, H_in, H_out, tn, tk,
                          tm_max=tm_max, compute_dtype=compute_dtype)

    return apply


# --------------------------------------------------------------------------- demo
if __name__ == "__main__":
    # Small shapes consistent with MLPLayer: batch=8, hidden_size=32.
    B, H = 8, 32
    key = jax.random.PRNGKey(0)
    k_x, k_w, k_b = jax.random.split(key, 3)

    features = jax.random.normal(k_x, (B, H), dtype=jnp.float32)
    # PyTorch nn.Linear stores weight as (out, in); we keep (in, out) == weight.T so
    # the kernel computes x @ W directly.
    weight = jax.random.normal(k_w, (H, H), dtype=jnp.float32) * 0.05
    bias = jax.random.normal(k_b, (H,), dtype=jnp.float32) * 0.01

    ref = jnp.tanh(features @ weight + bias[None, :])

    # Exact f32 path: bitwise semantics of the PyTorch module's forward.
    out_f32 = mlp_layer(features, weight, bias)
    jax.block_until_ready(out_f32)
    assert out_f32.shape == (B, H)
    assert jnp.allclose(out_f32, ref, atol=1e-5, rtol=1e-5)

    # Production path: params prepared (padded + cast) once, bf16 MXU feed, f32 accum.
    apply_fn = make_mlp_layer(weight, bias, compute_dtype=jnp.bfloat16)
    out_bf16 = apply_fn(features)
    jax.block_until_ready(out_bf16)
    assert out_bf16.shape == (B, H)
    assert jnp.allclose(out_bf16, ref, atol=2e-2, rtol=2e-2)

    print("KERNEL_OK")
</pallas_src>

<mosaic_0001>
module attributes {stable_mosaic.version = 11 : i64} {
  func.func @_mlp_kernel_inplace(%arg0: i32, %arg1: i32, %arg2: i32, %arg3: memref<8x128xf32, #tpu.memory_space<vmem>>, %arg4: memref<128x128xf32, #tpu.memory_space<vmem>>, %arg5: memref<1x128xf32, #tpu.memory_space<vmem>>, %arg6: memref<8x128xf32, #tpu.memory_space<vmem>>) attributes {dimension_semantics = [#tpu.dimension_semantics<parallel>, #tpu.dimension_semantics<parallel>, #tpu.dimension_semantics<arbitrary>], iteration_bounds = array<i64: 1, 1, 1>, scalar_prefetch = 0 : i64, scratch_operands = 0 : i64, tpu.core_type = #tpu.core_type<tc>, window_params = [{transform_indices = @transform_0, window_bounds = array<i64: 8, 128>}, {transform_indices = @transform_1, window_bounds = array<i64: 128, 128>}, {transform_indices = @transform_2, window_bounds = array<i64: 1, 128>}, {transform_indices = @transform_3, window_bounds = array<i64: 8, 128>}]} {
    %c0_i32 = arith.constant 0 : i32
    %0 = arith.cmpi eq, %arg2, %c0_i32 : i32
    %1 = arith.extui %0 : i1 to i32
    %c0_i32_0 = arith.constant 0 : i32
    %2 = arith.cmpi ne, %1, %c0_i32_0 : i32
    scf.if %2 {
      %cst_10 = arith.constant 0.000000e+00 : f32
      %12 = vector.broadcast %cst_10 : f32 to vector<8x128xf32>
      %c0_11 = arith.constant 0 : index
      %c0_12 = arith.constant 0 : index
      %13 = vector.load %arg6[%c0_11, %c0_12] : memref<8x128xf32, #tpu.memory_space<vmem>>, vector<8x128xf32>
      tpu.vector_store %arg6[%c0_11, %c0_12], %12 {strides = array<i32>} : memref<8x128xf32, #tpu.memory_space<vmem>>, vector<8x128xf32>,
    } else {
    }
    %c0 = arith.constant 0 : index
    %c0_1 = arith.constant 0 : index
    %3 = vector.load %arg6[%c0, %c0_1] : memref<8x128xf32, #tpu.memory_space<vmem>>, vector<8x128xf32>
    %c0_2 = arith.constant 0 : index
    %c0_3 = arith.constant 0 : index
    %4 = vector.load %arg3[%c0_2, %c0_3] : memref<8x128xf32, #tpu.memory_space<vmem>>, vector<8x128xf32>
    %c0_4 = arith.constant 0 : index
    %c0_5 = arith.constant 0 : index
    %5 = vector.load %arg4[%c0_4, %c0_5] : memref<128x128xf32, #tpu.memory_space<vmem>>, vector<128x128xf32>
    %cst = arith.constant dense<0.000000e+00> : vector<8x128xf32>
    %6 = tpu.matmul %4, %5, %cst {dimension_numbers = #tpu.dot_dimension_numbers<[1], [0], [0], [1], [0, 0, 1, 1], [], []>} : vector<8x128xf32>, vector<128x128xf32>, vector<8x128xf32> -> vector<8x128xf32>
    %7 = arith.addf %3, %6 : vector<8x128xf32>
    %c0_6 = arith.constant 0 : index
    %c0_7 = arith.constant 0 : index
    %8 = vector.load %arg6[%c0_6, %c0_7] : memref<8x128xf32, #tpu.memory_space<vmem>>, vector<8x128xf32>
    tpu.vector_store %arg6[%c0_6, %c0_7], %7 {strides = array<i32>} : memref<8x128xf32, #tpu.memory_space<vmem>>, vector<8x128xf32>,
    %c0_i32_8 = arith.constant 0 : i32
    %9 = arith.cmpi eq, %arg2, %c0_i32_8 : i32
    %10 = arith.extui %9 : i1 to i32
    %c0_i32_9 = arith.constant 0 : i32
    %11 = arith.cmpi ne, %10, %c0_i32_9 : i32
    scf.if %11 {
      %c0_10 = arith.constant 0 : index
      %c0_11 = arith.constant 0 : index
      %12 = vector.load %arg6[%c0_10, %c0_11] : memref<8x128xf32, #tpu.memory_space<vmem>>, vector<8x128xf32>
      %c0_12 = arith.constant 0 : index
      %c0_13 = arith.constant 0 : index
      %13 = vector.load %arg5[%c0_12, %c0_13] : memref<1x128xf32, #tpu.memory_space<vmem>>, vector<1x128xf32>
      %14 = vector.broadcast %13 : vector<1x128xf32> to vector<8x128xf32>
      %15 = arith.addf %12, %14 : vector<8x128xf32>
      %16 = math.tanh %15 : vector<8x128xf32>
      %c0_14 = arith.constant 0 : index
      %c0_15 = arith.constant 0 : index
      %17 = vector.load %arg6[%c0_14, %c0_15] : memref<8x128xf32, #tpu.memory_space<vmem>>, vector<8x128xf32>
      tpu.vector_store %arg6[%c0_14, %c0_15], %16 {strides = array<i32>} : memref<8x128xf32, #tpu.memory_space<vmem>>, vector<8x128xf32>,
    } else {
    }
    return
  }
  func.func @transform_0(%arg0: i32, %arg1: i32, %arg2: i32) -> (i32, i32) {
    %c0_i32 = arith.constant 0 : i32
    return %arg0, %arg2 : i32, i32
  }
  func.func @transform_1(%arg0: i32, %arg1: i32, %arg2: i32) -> (i32, i32) {
    %c0_i32 = arith.constant 0 : i32
    return %arg2, %arg1 : i32, i32
  }
  func.func @transform_2(%arg0: i32, %arg1: i32, %arg2: i32) -> (i32, i32) {
    %c0_i32 = arith.constant 0 : i32
    %c0_i32_0 = arith.constant 0 : i32
    return %c0_i32, %arg1 : i32, i32
  }
  func.func @transform_3(%arg0: i32, %arg1: i32, %arg2: i32) -> (i32, i32) {
    %c0_i32 = arith.constant 0 : i32
    return %arg0, %arg1 : i32, i32
  }
}

</mosaic_0001>

<llo_original>
// kernel: tpu_custom_call.1
$region0: #{tpu_custom_call.1}
  #allocation0 [shape = 'u32[]', space=smem, size = 0x4, offset = 0x4, fixed_abs, tag = 'smem constant byte address 0x4 - core index']
  #allocation1 [shape = 'u32[144,128]{1,0:T(1,128)}', space=vmem, size = 0x12000, scoped, tag = 'internal scratch']
  %s0 = inlined_call_operand.hbm [shape: f32[8,128], index: 0, kind: input, shape index: {}]
  %s1 = inlined_call_operand.hbm [shape: f32[128,128], index: 1, kind: input, shape index: {}]
  %s2 = inlined_call_operand.vmem [shape: f32[1,128], index: 2, kind: input, shape index: {}]
  %s3 = inlined_call_operand.hbm [shape: f32[8,128], index: 3, kind: output, shape index: {}]
  %s4 = sld [smem:[#allocation0]]
  $region38: #{tpu_custom_call.1} parent=0
    _
  %s6 = ssub.s32 1, %s4
  %s7 = scalar_select 0, %s6, %s4
  $region1: #{tpu_custom_call.1} parent=0
    #allocation2 [shape = 'u8[4096]{0}', space=vmem, size = 0x1000, scoped, tag = 'input window, operand 0, single buffered']
    #allocation3 [shape = 's32[1]{0}', space=sflag, size = 0x4, scoped, tag = 'scoped memory for tpu_custom_call.1']
    #allocation4 [shape = 's32[1]{0}', space=sflag, size = 0x4, scoped, tag = 'scoped memory for tpu_custom_call.1']
    #allocation5 [shape = 'u8[65536]{0}', space=vmem, size = 0x10000, scoped, tag = 'input window, operand 1, single buffered']
    #allocation6 [shape = 's32[1]{0}', space=sflag, size = 0x4, scoped, tag = 'scoped memory for tpu_custom_call.1']
    #allocation7 [shape = 'u8[4096]{0}', space=vmem, size = 0x1000, scoped, tag = 'output window, operand 0, single buffered']
    %8 = vsyncpa [#allocation3], 0
    %9 = vsyncpa [#allocation6], 0
    %10 = vsyncpa [#allocation4], 0
    // Predicated region
    $region2: #{tpu_custom_call.1} parent=1 // pred_check
      _
    $region3: #{tpu_custom_call.1} parent=1 // pred_check_branch
      %12 = sbr.rel (0) target = $region5
    $region4: #{tpu_custom_call.1} parent=1 // pred_region
      %s14 = ssub.s32 128, 128
      %15 = vsyncadd [#allocation3], %s14
      %s17 = sshll.u32 [#allocation2], 4
      %s18 = int_to_ptr.vmem [resolvable:$true] %s17
      %20 = dma.hbm_to_vmem [thread:$0]  %s0, 128, %s18, [#allocation3]
    $region5: #{tpu_custom_call.1} parent=1 // pred_fallthru
      _
    // Predicated region
    $region6: #{tpu_custom_call.1} parent=1 // pred_check
      _
    $region7: #{tpu_custom_call.1} parent=1 // pred_check_branch
      %22 = sbr.rel (0) target = $region9
    $region8: #{tpu_custom_call.1} parent=1 // pred_region
      %s24 = ssub.s32 2048, 2048
      %25 = vsyncadd [#allocation6], %s24
      %s26 = sshll.u32 [#allocation5], 4
      %s27 = int_to_ptr.vmem [resolvable:$true] %s26
      %32 = dma.hbm_to_vmem [thread:$0]  %s1, 2048, %s27, [#allocation6], 128, 128, 8
    $region9: #{tpu_custom_call.1} parent=1 // pred_fallthru
      _
    // Predicated region
    $region10: #{tpu_custom_call.1} parent=1 // pred_check
      _
    $region11: #{tpu_custom_call.1} parent=1 // pred_check_branch
      %34 = sbr.rel (0) target = $region13
    $region12: #{tpu_custom_call.1} parent=1 // pred_region
      _
    $region13: #{tpu_custom_call.1} parent=1 // pred_fallthru
      _
    // Predicated region
    $region14: #{tpu_custom_call.1} parent=1 // pred_check
      _
    $region15: #{tpu_custom_call.1} parent=1 // pred_check_branch
      %36 = sbr.rel (0) target = $region17
    $region16: #{tpu_custom_call.1} parent=1 // pred_region
      %37 = dma.done [#allocation3], 128
    $region17: #{tpu_custom_call.1} parent=1 // pred_fallthru
      _
    // Predicated region
    $region18: #{tpu_custom_call.1} parent=1 // pred_check
      _
    $region19: #{tpu_custom_call.1} parent=1 // pred_check_branch
      %39 = sbr.rel (0) target = $region21
    $region20: #{tpu_custom_call.1} parent=1 // pred_region
      %40 = dma.done [#allocation6], 2048
    $region21: #{tpu_custom_call.1} parent=1 // pred_fallthru
      _
    %p41 = scmp.eq.s32.totalorder 0, 0
    // Predicated region
    $region22: #{tpu_custom_call.1} parent=1 // pred_check
      %p42 = pneg %p41
    $region23: #{tpu_custom_call.1} parent=1 // pred_check_branch
      %44 = sbr.rel (%p42) target = $region25
    $region24: #{tpu_custom_call.1} parent=1 // pred_region
      %45 = vst [vmem:[#allocation7] sm:$0xff] 0.0
    $region25: #{tpu_custom_call.1} parent=1 // pred_fallthru
      _
    %v46 = vld [vmem:[#allocation7] sm:$0xff]
    %v47 = vld [vmem:[#allocation2] sm:$0xff]
    %v48 = vld [vmem:[#allocation5] sm:$0xff]
    %v49 = vld [vmem:[#allocation5 + $0x8] sm:$0xff]
    %v50 = vld [vmem:[#allocation5 + $0x10] sm:$0xff]
    %v51 = vld [vmem:[#allocation5 + $0x18] sm:$0xff]
    %v52 = vld [vmem:[#allocation5 + $0x20] sm:$0xff]
    %v53 = vld [vmem:[#allocation5 + $0x28] sm:$0xff]
    %v54 = vld [vmem:[#allocation5 + $0x30] sm:$0xff]
    %v55 = vld [vmem:[#allocation5 + $0x38] sm:$0xff]
    %v56 = vld [vmem:[#allocation5 + $0x40] sm:$0xff]
    %v57 = vld [vmem:[#allocation5 + $0x48] sm:$0xff]
    %v58 = vld [vmem:[#allocation5 + $0x50] sm:$0xff]
    %v59 = vld [vmem:[#allocation5 + $0x58] sm:$0xff]
    %v60 = vld [vmem:[#allocation5 + $0x60] sm:$0xff]
    %v61 = vld [vmem:[#allocation5 + $0x68] sm:$0xff]
    %v62 = vld [vmem:[#allocation5 + $0x70] sm:$0xff]
    %v63 = vld [vmem:[#allocation5 + $0x78] sm:$0xff]
    %64 = vmatprep.subr.mxu0 0.0
    %65 = vmatpush1.msra.mxu0 %v48
    %66 = vmatprep.subr.mxu0 0.0
    %67 = vmatpush1.msra.mxu0 %v49
    %68 = vmatprep.subr.mxu0 0.0
    %69 = vmatpush1.msra.mxu0 %v50
    %70 = vmatprep.subr.mxu0 0.0
    %71 = vmatpush1.msra.mxu0 %v51
    %72 = vmatprep.subr.mxu0 0.0
    %73 = vmatpush1.msra.mxu0 %v52
    %74 = vmatprep.subr.mxu0 0.0
    %75 = vmatpush1.msra.mxu0 %v53
    %76 = vmatprep.subr.mxu0 0.0
    %77 = vmatpush1.msra.mxu0 %v54
    %78 = vmatprep.subr.mxu0 0.0
    %79 = vmatpush1.msra.mxu0 %v55
    %80 = vmatprep.subr.mxu0 0.0
    %81 = vmatpush1.msra.mxu0 %v56
    %82 = vmatprep.subr.mxu0 0.0
    %83 = vmatpush1.msra.mxu0 %v57
    %84 = vmatprep.subr.mxu0 0.0
    %85 = vmatpush1.msra.mxu0 %v58
    %86 = vmatprep.subr.mxu0 0.0
    %87 = vmatpush1.msra.mxu0 %v59
    %88 = vmatprep.subr.mxu0 0.0
    %89 = vmatpush1.msra.mxu0 %v60
    %90 = vmatprep.subr.mxu0 0.0
    %91 = vmatpush1.msra.mxu0 %v61
    %92 = vmatprep.subr.mxu0 0.0
    %93 = vmatpush1.msra.mxu0 %v62
    %94 = vmatprep.subr.mxu0 0.0
    %95 = vmatpush1.msra.mxu0 %v63
    %96 = vmatprep.subr.mxu0 0.0
    %97 = vmatpush1.msra.mxu0 0.0
    %98 = vmatprep.subr.mxu0 0.0
    %99 = vmatpush1.msra.mxu0 0.0
    %100 = vmatprep.subr.mxu0 0.0
    %101 = vmatpush1.msra.mxu0 0.0
    %102 = vmatprep.subr.mxu0 0.0
    %103 = vmatpush1.msra.mxu0 0.0
    %104 = vmatprep.subr.mxu0 0.0
    %105 = vmatpush1.msra.mxu0 0.0
    %106 = vmatprep.subr.mxu0 0.0
    %107 = vmatpush1.msra.mxu0 0.0
    %108 = vmatprep.subr.mxu0 0.0
    %109 = vmatpush1.msra.mxu0 0.0
    %110 = vmatprep.subr.mxu0 0.0
    %111 = vmatpush1.msra.mxu0 0.0
    %112 = vmatprep.subr.mxu0 0.0
    %113 = vmatpush1.msra.mxu0 0.0
    %114 = vmatprep.subr.mxu0 0.0
    %115 = vmatpush1.msra.mxu0 0.0
    %116 = vmatprep.subr.mxu0 0.0
    %117 = vmatpush1.msra.mxu0 0.0
    %118 = vmatprep.subr.mxu0 0.0
    %119 = vmatpush1.msra.mxu0 0.0
    %120 = vmatprep.subr.mxu0 0.0
    %121 = vmatpush1.msra.mxu0 0.0
    %122 = vmatprep.subr.mxu0 0.0
    %123 = vmatpush1.msra.mxu0 0.0
    %124 = vmatprep.subr.mxu0 0.0
    %125 = vmatpush1.msra.mxu0 0.0
    %126 = vmatprep.subr.mxu0 0.0
    %127 = vmatpush1.msra.mxu0 0.0
    %128 = vmatprep.mubr.f32.mxu0 0.0
    %129 = vmatmul.mubr.f32.gmra.mrb[0].mxu0 %v47
    %v130 = vpop.f32.mrb[0].mxu0
    %v131 = vadd.f32 0.0, %v130
    %v132 = vpop.f32.mrb[0].mxu0
    %133 = vdwg.mxu0
    %v134 = vadd.f32 %v46, %v131
    %135 = vst [vmem:[#allocation7] sm:$0xff] %v134
    // Predicated region
    $region26: #{tpu_custom_call.1} parent=1 // pred_check
      %p136 = pneg %p41
    $region27: #{tpu_custom_call.1} parent=1 // pred_check_branch
      %138 = sbr.rel (%p136) target = $region29
    $region28: #{tpu_custom_call.1} parent=1 // pred_region
      %v139 = vld [vmem:[#allocation7] sm:$0xff]
      %v140 = vld [vmem:[%s2] sm:$0x1]
      %v142 = vlaneseq
      %v143 = vshrl.u32 %v142, 7
      %v144 = vsub.s32 0, %v143
      %v145 = vrot.slane %v140, %v144
      %v147 = vadd.f32 %v139, %v145
      %v148 = vtanh.pop %v147
      %149 = vst [vmem:[#allocation7] sm:$0xff] %v148
    $region29: #{tpu_custom_call.1} parent=1 // pred_fallthru
      _
    // Predicated region
    $region30: #{tpu_custom_call.1} parent=1 // pred_check
      _
    $region31: #{tpu_custom_call.1} parent=1 // pred_check_branch
      %151 = sbr.rel (0) target = $region33
    $region32: #{tpu_custom_call.1} parent=1 // pred_region
      %s153 = ssub.s32 128, 128
      %154 = vsyncadd [#allocation4], %s153
      %s156 = sshll.u32 [#allocation7], 4
      %s157 = int_to_ptr.vmem [resolvable:$true] %s156
      %159 = dma.vmem_to_hbm [thread:$0]  %s157, 128, %s3, [#allocation4]
    $region33: #{tpu_custom_call.1} parent=1 // pred_fallthru
      _
    // Predicated region
    $region34: #{tpu_custom_call.1} parent=1 // pred_check
      _
    $region35: #{tpu_custom_call.1} parent=1 // pred_check_branch
      %161 = sbr.rel (0) target = $region37
    $region36: #{tpu_custom_call.1} parent=1 // pred_region
      %162 = dma.done [#allocation4], 128
    $region37: #{tpu_custom_call.1} parent=1 // pred_fallthru
      _
    %163 = vsyncpa [#allocation3], 1
    %164 = vsyncpa [#allocation6], 1
    %165 = vsyncpa [#allocation4], 1

</llo_original>
